<compile_context>
chip_gen: v5e
topology: v5e:2x2
jax: 0.10.0
libtpu: 0.0.40
codegen_flags: <defaults>
</compile_context>

<pallas_src>
import numpy as np

import jax
import jax.numpy as jnp
from jax import lax
from jax.experimental import pallas as pl
from jax.experimental.pallas import tpu as pltpu


# ----------------------------- configuration -------------------------------
IN_CH = 4
OUT_CH = 8
L_IN = 32
KSIZE = 3
STRIDE = 1
POOL = 2
POOL_STRIDE = 2
DROPOUT_P = 0.1          # eval mode -> identity
PAD = KSIZE // 2
EPS = 1e-5

L1 = (L_IN + 2 * PAD - KSIZE) // STRIDE + 1          # after conv1   (=32)
L2 = (L1 + 2 * PAD - KSIZE) // STRIDE + 1            # after conv2   (=32)
L_POOL = (L2 - POOL) // POOL_STRIDE + 1              # after maxpool (=16)

IN_FLAT = IN_CH * L_IN          # 128 : lane-dense input slab (Cin*L)
MID_FLAT = OUT_CH * L1          # 256 : conv1 output, channel-major (c*L1 + l)
OUT_FLAT = OUT_CH * L_POOL      # 128 : lane-dense output slab (c*Lp + p)
WIDE2 = POOL * OUT_FLAT         # 256 : pool windows in separate 128-lane halves

NB_MAX = 2048                   # batch rows per grid step (tunable; sweep)
MIN_ROWS = 16                   # row granularity (bf16 sublane packing = 16)


# ------------------------------- kernel ------------------------------------
def convblock_kernel(x_ref, w1_ref, b1_ref, w2_ref, b2_ref, out_ref):
    """One batch block (NB samples) per grid step.

    x_ref:   (NB, IN_FLAT)  bf16   flattened (Cin*L) input rows, lane-dense
    w1_ref:  (IN_FLAT, MID_FLAT)  bf16  conv1 banded matrix, BN1 scale folded
    b1_ref:  (1, MID_FLAT)  f32    BN1 shift tiled per (channel, position)
    w2_ref:  (MID_FLAT, WIDE2) bf16 conv2 banded matrix, BN2 scale folded,
                                    columns permuted so pool-window elements
                                    sit in separate 128-lane halves
    b2_ref:  (1, WIDE2)     f32    BN2 shift in the same permuted order
    out_ref: (NB, OUT_FLAT) f32    lane-dense (Cout*L_POOL) output slab
    """
    x = x_ref[...]

    # conv1 (+BN1 scale): bf16 operands, f32 accumulation, then shift + ReLU.
    y1 = jnp.dot(x, w1_ref[...], preferred_element_type=jnp.float32)
    y1 = jnp.maximum(y1 + b1_ref[...], 0.0)

    # conv2 (+BN2 scale): recast activations to bf16 for the MXU, f32 acc.
    y2 = jnp.dot(y1.astype(jnp.bfloat16), w2_ref[...],
                 preferred_element_type=jnp.float32)
    y2 = jnp.maximum(y2 + b2_ref[...], 0.0)

    # MaxPool1d: pool-window elements live in separate lane-aligned halves.
    pooled = y2[:, :OUT_FLAT]
    for j in range(1, POOL):
        pooled = jnp.maximum(pooled, y2[:, j * OUT_FLAT:(j + 1) * OUT_FLAT])

    # Dropout: inference mode -> identity.
    # TODO(synk): train-mode dropout (random mask / (1-p) scaling) not implemented.
    out_ref[...] = pooled.astype(out_ref.dtype)


# --------------- one-time weight preparation (hoisted out of forward) -------
def _band(tap, l_in, l_out):
    """(l_in, l_out) 0/1 matrix: 1 where li == lo*STRIDE + tap - PAD.
    Out-of-range source positions never match -> implements conv zero-padding."""
    lo_src = np.arange(l_out) * STRIDE + tap - PAD
    li = np.arange(l_in)
    return (li[:, None] == lo_src[None, :]).astype(np.float32)


def _conv_as_matrix(w_scaled, l_in, l_out):
    """w_scaled: (K, Cin, Cout) -> dense (Cin*l_in, Cout*l_out) banded matrix."""
    cin, cout = w_scaled.shape[1], w_scaled.shape[2]
    s = jnp.asarray(np.stack([_band(t, l_in, l_out) for t in range(KSIZE)]))
    big = (w_scaled[:, :, None, :, None] * s[:, None, :, None, :]).sum(0)
    return big.reshape(cin * l_in, cout * l_out)


def _pool_perm():
    """Column permutation placing pool-window element j of (c, p) at
    j*OUT_FLAT + c*L_POOL + p (source column c*L2 + p*POOL_STRIDE + j)."""
    cols = []
    for j in range(POOL):
        for c in range(OUT_CH):
            for p in range(L_POOL):
                cols.append(c * L2 + (p * POOL_STRIDE + j))
    return np.asarray(cols, dtype=np.int32)


def prepare_convblock_params(w1_oik, w2_oik, bn1, bn2):
    """Fold BN (inference) into banded conv matrices.  Call ONCE; the results
    are reused by every convblock_forward call.

    w*_oik: PyTorch Conv1d weights, layout (Cout, Cin, K).
    bn*:    (gamma, beta, running_mean, running_var), each (Cout,).
    """
    # PyTorch (Cout, Cin, K) -> tap-major (K, Cin, Cout)
    w1 = jnp.transpose(jnp.asarray(w1_oik, jnp.float32), (2, 1, 0))
    w2 = jnp.transpose(jnp.asarray(w2_oik, jnp.float32), (2, 1, 0))

    g1, b1, m1, v1 = [jnp.asarray(a, jnp.float32) for a in bn1]
    g2, b2, m2, v2 = [jnp.asarray(a, jnp.float32) for a in bn2]
    s1 = g1 / jnp.sqrt(v1 + EPS)
    sh1 = b1 - m1 * s1
    s2 = g2 / jnp.sqrt(v2 + EPS)
    sh2 = b2 - m2 * s2

    # BN scale folded into conv weights; conv zero-padding folded into bands.
    w1_big = _conv_as_matrix(w1 * s1[None, None, :], L_IN, L1)        # (128,256)
    w2_full = _conv_as_matrix(w2 * s2[None, None, :], L1, L2)         # (256,256)
    perm = _pool_perm()
    w2_big = w2_full[:, perm]                                         # (256,256)
    b1_big = jnp.repeat(sh1, L1)[None, :]                             # (1,256)
    b2_big = jnp.repeat(sh2, L2)[perm][None, :]                       # (1,256)

    # bf16 matmul operands (MXU-native); shifts stay f32 (added post-acc).
    return (w1_big.astype(jnp.bfloat16), b1_big.astype(jnp.float32),
            w2_big.astype(jnp.bfloat16), b2_big.astype(jnp.float32))


# ------------------------------- wrapper ------------------------------------
def _round_up(x, m):
    return (x + m - 1) // m * m


@jax.jit
def convblock_forward(x_ncl, w1_big, b1_big, w2_big, b2_big):
    """x_ncl: (N, Cin, L) as in PyTorch.  Returns (N, Cout, L_POOL) f32."""
    n = x_ncl.shape[0]

    # Lane-dense (N, 128) input slab, cast to bf16 (halves input DMA).
    x_flat = x_ncl.reshape(n, IN_FLAT).astype(jnp.bfloat16)

    # Grid sizing: big batch blocks to amortize per-step overhead, but at
    # least 2 steps when possible so the 'parallel' axis shards across both
    # v7x TensorCores.  Only pad up to the 16-row granularity times steps.
    n16 = _round_up(n, MIN_ROWS)
    steps = max(1, pl.cdiv(n16, NB_MAX))
    if n16 >= 2 * MIN_ROWS:
        steps = max(steps, 2)
    nb = _round_up(pl.cdiv(n16, steps), MIN_ROWS)
    n_total = nb * steps
    if n_total != n:
        x_flat = jnp.pad(x_flat, ((0, n_total - n), (0, 0)))

    out = pl.pallas_call(
        convblock_kernel,
        out_shape=jax.ShapeDtypeStruct((n_total, OUT_FLAT), jnp.float32),
        grid_spec=pltpu.PrefetchScalarGridSpec(
            num_scalar_prefetch=0,
            grid=(steps,),
            in_specs=[
                pl.BlockSpec((nb, IN_FLAT), lambda i: (i, 0)),
                # Constant operands (index_map is constant -> DMA'd once).
                pl.BlockSpec((IN_FLAT, MID_FLAT), lambda i: (0, 0)),
                pl.BlockSpec((1, MID_FLAT), lambda i: (0, 0)),
                pl.BlockSpec((MID_FLAT, WIDE2), lambda i: (0, 0)),
                pl.BlockSpec((1, WIDE2), lambda i: (0, 0)),
            ],
            out_specs=pl.BlockSpec((nb, OUT_FLAT), lambda i: (i, 0)),
        ),
        compiler_params=pltpu.CompilerParams(
            dimension_semantics=("parallel",),
            # NB=2048 working set ~10 MiB; 32 MiB keeps headroom on v5e's
            # 16 MiB scoped default and is safe on v6e/v7x.
            vmem_limit_bytes=32 * 1024 * 1024),
    )(x_flat, w1_big, b1_big, w2_big, b2_big)

    # Output columns are channel-major (c*L_POOL + p): reshape directly to NCL.
    return out[:n].reshape(n, OUT_CH, L_POOL)


# --------------------------- pure-JAX reference ------------------------------
def convblock_reference(x_ncl, w1_oik, w2_oik, bn1, bn2):
    x = jnp.transpose(x_ncl, (0, 2, 1)).astype(jnp.float32)  # NLC
    w1 = jnp.transpose(w1_oik, (2, 1, 0))  # (K, Cin, Cout)
    w2 = jnp.transpose(w2_oik, (2, 1, 0))

    def conv1d(x, w):  # x: (N, L, Cin), w: (K, Cin, Cout)
        return lax.conv_general_dilated(
            x, w, window_strides=(STRIDE,), padding=[(PAD, PAD)],
            dimension_numbers=("NWC", "WIO", "NWC"))

    def bn_relu(x, params):
        g, b, m, v = params
        return jnp.maximum((x - m) / jnp.sqrt(v + EPS) * g + b, 0.0)

    y = bn_relu(conv1d(x, w1), bn1)
    y = bn_relu(conv1d(y, w2), bn2)
    y = lax.reduce_window(y, -jnp.inf, lax.max,
                          window_dimensions=(1, POOL, 1),
                          window_strides=(1, POOL_STRIDE, 1),
                          padding="VALID")
    return jnp.transpose(y, (0, 2, 1))


# --------------------------------- main --------------------------------------
if __name__ == "__main__":
    key = jax.random.PRNGKey(0)
    keys = jax.random.split(key, 11)

    N = 2
    x = jax.random.normal(keys[0], (N, IN_CH, L_IN), jnp.float32)

    # Conv weights in PyTorch Conv1d layout (Cout, Cin, K), bias=False.
    w1 = jax.random.normal(keys[1], (OUT_CH, IN_CH, KSIZE), jnp.float32) * 0.1
    w2 = jax.random.normal(keys[2], (OUT_CH, OUT_CH, KSIZE), jnp.float32) * 0.1

    bn1 = (1.0 + 0.1 * jax.random.normal(keys[3], (OUT_CH,), jnp.float32),
           0.1 * jax.random.normal(keys[4], (OUT_CH,), jnp.float32),
           0.1 * jax.random.normal(keys[5], (OUT_CH,), jnp.float32),
           0.5 + jnp.abs(jax.random.normal(keys[6], (OUT_CH,), jnp.float32)))
    bn2 = (1.0 + 0.1 * jax.random.normal(keys[7], (OUT_CH,), jnp.float32),
           0.1 * jax.random.normal(keys[8], (OUT_CH,), jnp.float32),
           0.1 * jax.random.normal(keys[9], (OUT_CH,), jnp.float32),
           0.5 + jnp.abs(jax.random.normal(keys[10], (OUT_CH,), jnp.float32)))

    # One-time weight preparation (hoisted out of the forward path).
    params = prepare_convblock_params(w1, w2, bn1, bn2)

    out = convblock_forward(x, *params)
    out = jax.block_until_ready(out)

    ref = convblock_reference(x, w1, w2, bn1, bn2)
    assert out.shape == (N, OUT_CH, L_POOL), out.shape
    # bf16 matmul operands with f32 accumulation -> relaxed tolerance vs f32 ref.
    assert jnp.allclose(out, ref, atol=2e-2, rtol=2e-2), (
        float(jnp.max(jnp.abs(out - ref))))

    print("KERNEL_OK")
</pallas_src>

<mosaic_0001>
module attributes {stable_mosaic.version = 11 : i64} {
  func.func @convblock_kernel(%arg0: i32, %arg1: memref<16x128xbf16, #tpu.memory_space<vmem>>, %arg2: memref<128x256xbf16, #tpu.memory_space<vmem>>, %arg3: memref<1x256xf32, #tpu.memory_space<vmem>>, %arg4: memref<256x256xbf16, #tpu.memory_space<vmem>>, %arg5: memref<1x256xf32, #tpu.memory_space<vmem>>, %arg6: memref<16x128xf32, #tpu.memory_space<vmem>>) attributes {dimension_semantics = [#tpu.dimension_semantics<parallel>], iteration_bounds = array<i64: 1>, scalar_prefetch = 0 : i64, scratch_operands = 0 : i64, tpu.core_type = #tpu.core_type<tc>, window_params = [{transform_indices = @transform_0, window_bounds = array<i64: 16, 128>}, {pipeline_mode = #tpu.pipeline_mode<synchronous>, transform_indices = @transform_1, window_bounds = array<i64: 128, 256>}, {pipeline_mode = #tpu.pipeline_mode<synchronous>, transform_indices = @transform_2, window_bounds = array<i64: 1, 256>}, {pipeline_mode = #tpu.pipeline_mode<synchronous>, transform_indices = @transform_3, window_bounds = array<i64: 256, 256>}, {pipeline_mode = #tpu.pipeline_mode<synchronous>, transform_indices = @transform_4, window_bounds = array<i64: 1, 256>}, {transform_indices = @transform_5, window_bounds = array<i64: 16, 128>}]} {
    %c0 = arith.constant 0 : index
    %c0_0 = arith.constant 0 : index
    %0 = vector.load %arg1[%c0, %c0_0] : memref<16x128xbf16, #tpu.memory_space<vmem>>, vector<16x128xbf16>
    %c0_1 = arith.constant 0 : index
    %c0_2 = arith.constant 0 : index
    %1 = vector.load %arg2[%c0_1, %c0_2] : memref<128x256xbf16, #tpu.memory_space<vmem>>, vector<128x256xbf16>
    %cst = arith.constant dense<0.000000e+00> : vector<16x256xf32>
    %2 = tpu.matmul %0, %1, %cst {dimension_numbers = #tpu.dot_dimension_numbers<[1], [0], [0], [1], [0, 0, 1, 1], [], []>} : vector<16x128xbf16>, vector<128x256xbf16>, vector<16x256xf32> -> vector<16x256xf32>
    %c0_3 = arith.constant 0 : index
    %c0_4 = arith.constant 0 : index
    %3 = vector.load %arg3[%c0_3, %c0_4] : memref<1x256xf32, #tpu.memory_space<vmem>>, vector<1x256xf32>
    %4 = vector.broadcast %3 : vector<1x256xf32> to vector<16x256xf32>
    %5 = arith.addf %2, %4 : vector<16x256xf32>
    %cst_5 = arith.constant 0.000000e+00 : f32
    %6 = vector.broadcast %cst_5 : f32 to vector<16x256xf32>
    %7 = arith.maximumf %5, %6 : vector<16x256xf32>
    %8 = arith.truncf %7 : vector<16x256xf32> to vector<16x256xbf16>
    %c0_6 = arith.constant 0 : index
    %c0_7 = arith.constant 0 : index
    %9 = vector.load %arg4[%c0_6, %c0_7] : memref<256x256xbf16, #tpu.memory_space<vmem>>, vector<256x256xbf16>
    %cst_8 = arith.constant dense<0.000000e+00> : vector<16x256xf32>
    %10 = tpu.matmul %8, %9, %cst_8 {dimension_numbers = #tpu.dot_dimension_numbers<[1], [0], [0], [1], [0, 0, 1, 1], [], []>} : vector<16x256xbf16>, vector<256x256xbf16>, vector<16x256xf32> -> vector<16x256xf32>
    %c0_9 = arith.constant 0 : index
    %c0_10 = arith.constant 0 : index
    %11 = vector.load %arg5[%c0_9, %c0_10] : memref<1x256xf32, #tpu.memory_space<vmem>>, vector<1x256xf32>
    %12 = vector.broadcast %11 : vector<1x256xf32> to vector<16x256xf32>
    %13 = arith.addf %10, %12 : vector<16x256xf32>
    %cst_11 = arith.constant 0.000000e+00 : f32
    %14 = vector.broadcast %cst_11 : f32 to vector<16x256xf32>
    %15 = arith.maximumf %13, %14 : vector<16x256xf32>
    %16 = vector.extract_strided_slice %15 {offsets = [0, 0], sizes = [16, 128], strides = [1, 1]} : vector<16x256xf32> to vector<16x128xf32>
    %17 = vector.extract_strided_slice %15 {offsets = [0, 128], sizes = [16, 128], strides = [1, 1]} : vector<16x256xf32> to vector<16x128xf32>
    %18 = arith.maximumf %16, %17 : vector<16x128xf32>
    %c0_12 = arith.constant 0 : index
    %c0_13 = arith.constant 0 : index
    %19 = vector.load %arg6[%c0_12, %c0_13] : memref<16x128xf32, #tpu.memory_space<vmem>>, vector<16x128xf32>
    tpu.vector_store %arg6[%c0_12, %c0_13], %18 {strides = array<i32>} : memref<16x128xf32, #tpu.memory_space<vmem>>, vector<16x128xf32>,
    return
  }
  func.func @transform_0(%arg0: i32) -> (i32, i32) {
    %c0_i32 = arith.constant 0 : i32
    %c0_i32_0 = arith.constant 0 : i32
    return %arg0, %c0_i32 : i32, i32
  }
  func.func @transform_1(%arg0: i32) -> (i32, i32) {
    %c0_i32 = arith.constant 0 : i32
    %c0_i32_0 = arith.constant 0 : i32
    %c0_i32_1 = arith.constant 0 : i32
    return %c0_i32, %c0_i32_0 : i32, i32
  }
  func.func @transform_2(%arg0: i32) -> (i32, i32) {
    %c0_i32 = arith.constant 0 : i32
    %c0_i32_0 = arith.constant 0 : i32
    %c0_i32_1 = arith.constant 0 : i32
    return %c0_i32, %c0_i32_0 : i32, i32
  }
  func.func @transform_3(%arg0: i32) -> (i32, i32) {
    %c0_i32 = arith.constant 0 : i32
    %c0_i32_0 = arith.constant 0 : i32
    %c0_i32_1 = arith.constant 0 : i32
    return %c0_i32, %c0_i32_0 : i32, i32
  }
  func.func @transform_4(%arg0: i32) -> (i32, i32) {
    %c0_i32 = arith.constant 0 : i32
    %c0_i32_0 = arith.constant 0 : i32
    %c0_i32_1 = arith.constant 0 : i32
    return %c0_i32, %c0_i32_0 : i32, i32
  }
  func.func @transform_5(%arg0: i32) -> (i32, i32) {
    %c0_i32 = arith.constant 0 : i32
    %c0_i32_0 = arith.constant 0 : i32
    return %arg0, %c0_i32 : i32, i32
  }
}

</mosaic_0001>

<llo_original>
// kernel: convblock_forward.1
$region0: #{convblock_forward.1}
  #allocation0 [shape = 'u32[]', space=smem, size = 0x4, offset = 0x4, fixed_abs, tag = 'smem constant byte address 0x4 - core index']
  #allocation1 [shape = 'u32[72,128]{1,0:T(1,128)}', space=vmem, size = 0x9000, scoped, tag = 'internal scratch']
  %s0 = inlined_call_operand.vmem [shape: bf16[16,128], index: 0, kind: input, shape index: {}]
  %s1 = inlined_call_operand.hbm [shape: bf16[128,256], index: 1, kind: input, shape index: {}]
  %s2 = inlined_call_operand.vmem [shape: f32[1,256], index: 2, kind: input, shape index: {}]
  %s3 = inlined_call_operand.hbm [shape: bf16[256,256], index: 3, kind: input, shape index: {}]
  %s4 = inlined_call_operand.vmem [shape: f32[1,256], index: 4, kind: input, shape index: {}]
  %s5 = inlined_call_operand.vmem [shape: f32[16,128], index: 5, kind: output, shape index: {}]
  %s6 = sld [smem:[#allocation0]]
  $region38: #{convblock_forward.1} parent=0
    _
  %s8 = ssub.s32 1, %s6
  %s9 = scalar_select 0, %s8, %s6
  $region1: #{convblock_forward.1} parent=0
    #allocation2 [shape = 'u8[65536]{0}', space=vmem, size = 0x10000, scoped, tag = 'input window, operand 1, single buffered']
    #allocation3 [shape = 's32[1]{0}', space=sflag, size = 0x4, scoped, tag = 'scoped memory for convblock_forward.1']
    #allocation4 [shape = 'u8[131072]{0}', space=vmem, size = 0x20000, scoped, tag = 'input window, operand 3, single buffered']
    #allocation5 [shape = 's32[1]{0}', space=sflag, size = 0x4, scoped, tag = 'scoped memory for convblock_forward.1']
    %10 = vsyncpa [#allocation3], 0
    %11 = vsyncpa [#allocation5], 0
    // Predicated region
    $region2: #{convblock_forward.1} parent=1 // pred_check
      _
    $region3: #{convblock_forward.1} parent=1 // pred_check_branch
      %13 = sbr.rel (0) target = $region5
    $region4: #{convblock_forward.1} parent=1 // pred_region
      _
    $region5: #{convblock_forward.1} parent=1 // pred_fallthru
      _
    // Predicated region
    $region6: #{convblock_forward.1} parent=1 // pred_check
      _
    $region7: #{convblock_forward.1} parent=1 // pred_check_branch
      %15 = sbr.rel (0) target = $region9
    $region8: #{convblock_forward.1} parent=1 // pred_region
      %17 = vsyncadd [#allocation3], 0
      %s18 = sshll.u32 %s1, 4
      %s19 = int_to_ptr.hbm [resolvable:$true] %s18
      %s20 = sshll.u32 [#allocation2], 4
      %s21 = int_to_ptr.vmem [resolvable:$true] %s20
      %26 = dma.hbm_to_vmem [thread:$0]  %s19, 2048, %s21, [#allocation3], 128, 128, 8
    $region9: #{convblock_forward.1} parent=1 // pred_fallthru
      _
    // Predicated region
    $region10: #{convblock_forward.1} parent=1 // pred_check
      _
    $region11: #{convblock_forward.1} parent=1 // pred_check_branch
      %28 = sbr.rel (0) target = $region13
    $region12: #{convblock_forward.1} parent=1 // pred_region
      _
    $region13: #{convblock_forward.1} parent=1 // pred_fallthru
      _
    // Predicated region
    $region14: #{convblock_forward.1} parent=1 // pred_check
      _
    $region15: #{convblock_forward.1} parent=1 // pred_check_branch
      %30 = sbr.rel (0) target = $region17
    $region16: #{convblock_forward.1} parent=1 // pred_region
      %32 = vsyncadd [#allocation5], 0
      %s33 = sshll.u32 %s3, 4
      %s34 = int_to_ptr.hbm [resolvable:$true] %s33
      %s35 = sshll.u32 [#allocation4], 4
      %s36 = int_to_ptr.vmem [resolvable:$true] %s35
      %41 = dma.hbm_to_vmem [thread:$0]  %s34, 4096, %s36, [#allocation5], 128, 128, 8
    $region17: #{convblock_forward.1} parent=1 // pred_fallthru
      _
    // Predicated region
    $region18: #{convblock_forward.1} parent=1 // pred_check
      _
    $region19: #{convblock_forward.1} parent=1 // pred_check_branch
      %43 = sbr.rel (0) target = $region21
    $region20: #{convblock_forward.1} parent=1 // pred_region
      _
    $region21: #{convblock_forward.1} parent=1 // pred_fallthru
      _
    // Predicated region
    $region22: #{convblock_forward.1} parent=1 // pred_check
      _
    $region23: #{convblock_forward.1} parent=1 // pred_check_branch
      %45 = sbr.rel (0) target = $region25
    $region24: #{convblock_forward.1} parent=1 // pred_region
      %47 = dma.done [#allocation3], 2048
    $region25: #{convblock_forward.1} parent=1 // pred_fallthru
      _
    // Predicated region
    $region26: #{convblock_forward.1} parent=1 // pred_check
      _
    $region27: #{convblock_forward.1} parent=1 // pred_check_branch
      %49 = sbr.rel (0) target = $region29
    $region28: #{convblock_forward.1} parent=1 // pred_region
      %51 = dma.done [#allocation5], 4096
    $region29: #{convblock_forward.1} parent=1 // pred_fallthru
      _
    %v52 = vld [vmem:[%s0] sm:$0xf]
    %v53 = vld [vmem:[%s0 + $0x4] sm:$0xf]
    %v54 = vld [vmem:[#allocation2] sm:$0xff]
    %v55 = vld [vmem:[#allocation2 + $0x8] sm:$0xff]
    %v56 = vld [vmem:[#allocation2 + $0x10] sm:$0xff]
    %v57 = vld [vmem:[#allocation2 + $0x18] sm:$0xff]
    %v58 = vld [vmem:[#allocation2 + $0x20] sm:$0xff]
    %v59 = vld [vmem:[#allocation2 + $0x28] sm:$0xff]
    %v60 = vld [vmem:[#allocation2 + $0x30] sm:$0xff]
    %v61 = vld [vmem:[#allocation2 + $0x38] sm:$0xff]
    %v62 = vld [vmem:[#allocation2 + $0x40] sm:$0xff]
    %v63 = vld [vmem:[#allocation2 + $0x48] sm:$0xff]
    %v64 = vld [vmem:[#allocation2 + $0x50] sm:$0xff]
    %v65 = vld [vmem:[#allocation2 + $0x58] sm:$0xff]
    %v66 = vld [vmem:[#allocation2 + $0x60] sm:$0xff]
    %v67 = vld [vmem:[#allocation2 + $0x68] sm:$0xff]
    %v68 = vld [vmem:[#allocation2 + $0x70] sm:$0xff]
    %v69 = vld [vmem:[#allocation2 + $0x78] sm:$0xff]
    %v70 = vld [vmem:[%s2] sm:$0x3]
    %v72 = vperm.slane %v70, 0
    %v73 = vperm.slane %v70, 1
    %v78 = vunpack.c.l.b16 %v52
    %v79 = vunpack.c.l.b16 %v53
    %v80 = vpack.c.b16 %v79, %v78
    %v98 = vunpack.c.l.b16 %v54
    %v99 = vunpack.c.h.b16 %v54
    %v100 = vunpack.c.l.b16 %v55
    %v101 = vunpack.c.h.b16 %v55
    %v102 = vunpack.c.l.b16 %v56
    %v103 = vunpack.c.h.b16 %v56
    %v104 = vunpack.c.l.b16 %v57
    %v105 = vunpack.c.h.b16 %v57
    %v106 = vunpack.c.l.b16 %v58
    %v107 = vunpack.c.h.b16 %v58
    %v108 = vunpack.c.l.b16 %v59
    %v109 = vunpack.c.h.b16 %v59
    %v110 = vunpack.c.l.b16 %v60
    %v111 = vunpack.c.h.b16 %v60
    %v112 = vunpack.c.l.b16 %v61
    %v113 = vunpack.c.h.b16 %v61
    %v114 = vunpack.c.l.b16 %v62
    %v115 = vunpack.c.h.b16 %v62
    %v116 = vunpack.c.l.b16 %v63
    %v117 = vunpack.c.h.b16 %v63
    %v118 = vunpack.c.l.b16 %v64
    %v119 = vunpack.c.h.b16 %v64
    %v120 = vunpack.c.l.b16 %v65
    %v121 = vunpack.c.h.b16 %v65
    %v122 = vunpack.c.l.b16 %v66
    %v123 = vunpack.c.h.b16 %v66
    %v124 = vunpack.c.l.b16 %v67
    %v125 = vunpack.c.h.b16 %v67
    %v126 = vunpack.c.l.b16 %v68
    %v127 = vunpack.c.h.b16 %v68
    %v128 = vunpack.c.l.b16 %v69
    %v129 = vunpack.c.h.b16 %v69
    %v130 = vpack.c.b16 %v100, %v98
    %v131 = vpack.c.b16 %v101, %v99
    %v132 = vpack.c.b16 %v104, %v102
    %v133 = vpack.c.b16 %v105, %v103
    %v134 = vpack.c.b16 %v108, %v106
    %v135 = vpack.c.b16 %v109, %v107
    %v136 = vpack.c.b16 %v112, %v110
    %v137 = vpack.c.b16 %v113, %v111
    %v138 = vpack.c.b16 %v116, %v114
    %v139 = vpack.c.b16 %v117, %v115
    %v140 = vpack.c.b16 %v120, %v118
    %v141 = vpack.c.b16 %v121, %v119
    %v142 = vpack.c.b16 %v124, %v122
    %v143 = vpack.c.b16 %v125, %v123
    %v144 = vpack.c.b16 %v128, %v126
    %v145 = vpack.c.b16 %v129, %v127
    %162 = vmatpush.bf16.msra.mxu0 %v144
    %163 = vmatpush.bf16.msra.mxu0 %v142
    %164 = vmatpush.bf16.msra.mxu0 %v140
    %165 = vmatpush.bf16.msra.mxu0 %v138
    %166 = vmatpush.bf16.msra.mxu0 %v136
    %167 = vmatpush.bf16.msra.mxu0 %v134
    %168 = vmatpush.bf16.msra.mxu0 %v132
    %169 = vmatpush.bf16.msra.mxu0 %v130
    %170 = vmatmul.bf16.gmra.mxu0 %v80
    %v171 = vpop.f32.mrf.mxu0
    %v172 = vadd.f32 %v72, %v171
    %v173 = vpop.f32.mrf.mxu0
    %v174 = vadd.f32 %v72, %v173
    %175 = vdwg.mxu0
    %176 = vmatpush.bf16.msra.mxu0 %v145
    %177 = vmatpush.bf16.msra.mxu0 %v143
    %178 = vmatpush.bf16.msra.mxu0 %v141
    %179 = vmatpush.bf16.msra.mxu0 %v139
    %180 = vmatpush.bf16.msra.mxu0 %v137
    %181 = vmatpush.bf16.msra.mxu0 %v135
    %182 = vmatpush.bf16.msra.mxu0 %v133
    %183 = vmatpush.bf16.msra.mxu0 %v131
    %184 = vmatmul.bf16.gmra.mxu0 %v80
    %v185 = vpop.f32.mrf.mxu0
    %v186 = vadd.f32 %v73, %v185
    %v187 = vpop.f32.mrf.mxu0
    %v188 = vadd.f32 %v73, %v187
    %189 = vdwg.mxu0
    %v190 = vmax.f32 %v172, 0.0
    %v191 = vmax.f32 %v186, 0.0
    %v192 = vmax.f32 %v174, 0.0
    %v193 = vmax.f32 %v188, 0.0
    %v194 = vpack.c.bf16 %v192, %v190
    %v195 = vpack.c.bf16 %v193, %v191
    %v196 = vld [vmem:[#allocation4] sm:$0xff]
    %v197 = vld [vmem:[#allocation4 + $0x8] sm:$0xff]
    %v198 = vld [vmem:[#allocation4 + $0x10] sm:$0xff]
    %v199 = vld [vmem:[#allocation4 + $0x18] sm:$0xff]
    %v200 = vld [vmem:[#allocation4 + $0x20] sm:$0xff]
    %v201 = vld [vmem:[#allocation4 + $0x28] sm:$0xff]
    %v202 = vld [vmem:[#allocation4 + $0x30] sm:$0xff]
    %v203 = vld [vmem:[#allocation4 + $0x38] sm:$0xff]
    %v204 = vld [vmem:[#allocation4 + $0x40] sm:$0xff]
    %v205 = vld [vmem:[#allocation4 + $0x48] sm:$0xff]
    %v206 = vld [vmem:[#allocation4 + $0x50] sm:$0xff]
    %v207 = vld [vmem:[#allocation4 + $0x58] sm:$0xff]
    %v208 = vld [vmem:[#allocation4 + $0x60] sm:$0xff]
    %v209 = vld [vmem:[#allocation4 + $0x68] sm:$0xff]
    %v210 = vld [vmem:[#allocation4 + $0x70] sm:$0xff]
    %v211 = vld [vmem:[#allocation4 + $0x78] sm:$0xff]
    %v212 = vld [vmem:[#allocation4 + $0x80] sm:$0xff]
    %v213 = vld [vmem:[#allocation4 + $0x88] sm:$0xff]
    %v214 = vld [vmem:[#allocation4 + $0x90] sm:$0xff]
    %v215 = vld [vmem:[#allocation4 + $0x98] sm:$0xff]
    %v216 = vld [vmem:[#allocation4 + $0xa0] sm:$0xff]
    %v217 = vld [vmem:[#allocation4 + $0xa8] sm:$0xff]
    %v218 = vld [vmem:[#allocation4 + $0xb0] sm:$0xff]
    %v219 = vld [vmem:[#allocation4 + $0xb8] sm:$0xff]
    %v220 = vld [vmem:[#allocation4 + $0xc0] sm:$0xff]
    %v221 = vld [vmem:[#allocation4 + $0xc8] sm:$0xff]
    %v222 = vld [vmem:[#allocation4 + $0xd0] sm:$0xff]
    %v223 = vld [vmem:[#allocation4 + $0xd8] sm:$0xff]
    %v224 = vld [vmem:[#allocation4 + $0xe0] sm:$0xff]
    %v225 = vld [vmem:[#allocation4 + $0xe8] sm:$0xff]
    %v226 = vld [vmem:[#allocation4 + $0xf0] sm:$0xff]
    %v227 = vld [vmem:[#allocation4 + $0xf8] sm:$0xff]
    %v228 = vld [vmem:[%s4] sm:$0x3]
    %v230 = vperm.slane %v228, 0
    %v231 = vperm.slane %v228, 1
    %v266 = vunpack.c.l.b16 %v196
    %v267 = vunpack.c.h.b16 %v196
    %v268 = vunpack.c.l.b16 %v197
    %v269 = vunpack.c.h.b16 %v197
    %v270 = vunpack.c.l.b16 %v198
    %v271 = vunpack.c.h.b16 %v198
    %v272 = vunpack.c.l.b16 %v199
    %v273 = vunpack.c.h.b16 %v199
    %v274 = vunpack.c.l.b16 %v200
    %v275 = vunpack.c.h.b16 %v200
    %v276 = vunpack.c.l.b16 %v201
    %v277 = vunpack.c.h.b16 %v201
    %v278 = vunpack.c.l.b16 %v202
    %v279 = vunpack.c.h.b16 %v202
    %v280 = vunpack.c.l.b16 %v203
    %v281 = vunpack.c.h.b16 %v203
    %v282 = vunpack.c.l.b16 %v204
    %v283 = vunpack.c.h.b16 %v204
    %v284 = vunpack.c.l.b16 %v205
    %v285 = vunpack.c.h.b16 %v205
    %v286 = vunpack.c.l.b16 %v206
    %v287 = vunpack.c.h.b16 %v206
    %v288 = vunpack.c.l.b16 %v207
    %v289 = vunpack.c.h.b16 %v207
    %v290 = vunpack.c.l.b16 %v208
    %v291 = vunpack.c.h.b16 %v208
    %v292 = vunpack.c.l.b16 %v209
    %v293 = vunpack.c.h.b16 %v209
    %v294 = vunpack.c.l.b16 %v210
    %v295 = vunpack.c.h.b16 %v210
    %v296 = vunpack.c.l.b16 %v211
    %v297 = vunpack.c.h.b16 %v211
    %v298 = vunpack.c.l.b16 %v212
    %v299 = vunpack.c.h.b16 %v212
    %v300 = vunpack.c.l.b16 %v213
    %v301 = vunpack.c.h.b16 %v213
    %v302 = vunpack.c.l.b16 %v214
    %v303 = vunpack.c.h.b16 %v214
    %v304 = vunpack.c.l.b16 %v215
    %v305 = vunpack.c.h.b16 %v215
    %v306 = vunpack.c.l.b16 %v216
    %v307 = vunpack.c.h.b16 %v216
    %v308 = vunpack.c.l.b16 %v217
    %v309 = vunpack.c.h.b16 %v217
    %v310 = vunpack.c.l.b16 %v218
    %v311 = vunpack.c.h.b16 %v218
    %v312 = vunpack.c.l.b16 %v219
    %v313 = vunpack.c.h.b16 %v219
    %v314 = vunpack.c.l.b16 %v220
    %v315 = vunpack.c.h.b16 %v220
    %v316 = vunpack.c.l.b16 %v221
    %v317 = vunpack.c.h.b16 %v221
    %v318 = vunpack.c.l.b16 %v222
    %v319 = vunpack.c.h.b16 %v222
    %v320 = vunpack.c.l.b16 %v223
    %v321 = vunpack.c.h.b16 %v223
    %v322 = vunpack.c.l.b16 %v224
    %v323 = vunpack.c.h.b16 %v224
    %v324 = vunpack.c.l.b16 %v225
    %v325 = vunpack.c.h.b16 %v225
    %v326 = vunpack.c.l.b16 %v226
    %v327 = vunpack.c.h.b16 %v226
    %v328 = vunpack.c.l.b16 %v227
    %v329 = vunpack.c.h.b16 %v227
    %v330 = vpack.c.b16 %v268, %v266
    %v331 = vpack.c.b16 %v269, %v267
    %v332 = vpack.c.b16 %v272, %v270
    %v333 = vpack.c.b16 %v273, %v271
    %v334 = vpack.c.b16 %v276, %v274
    %v335 = vpack.c.b16 %v277, %v275
    %v336 = vpack.c.b16 %v280, %v278
    %v337 = vpack.c.b16 %v281, %v279
    %v338 = vpack.c.b16 %v284, %v282
    %v339 = vpack.c.b16 %v285, %v283
    %v340 = vpack.c.b16 %v288, %v286
    %v341 = vpack.c.b16 %v289, %v287
    %v342 = vpack.c.b16 %v292, %v290
    %v343 = vpack.c.b16 %v293, %v291
    %v344 = vpack.c.b16 %v296, %v294
    %v345 = vpack.c.b16 %v297, %v295
    %v346 = vpack.c.b16 %v300, %v298
    %v347 = vpack.c.b16 %v301, %v299
    %v348 = vpack.c.b16 %v304, %v302
    %v349 = vpack.c.b16 %v305, %v303
    %v350 = vpack.c.b16 %v308, %v306
    %v351 = vpack.c.b16 %v309, %v307
    %v352 = vpack.c.b16 %v312, %v310
    %v353 = vpack.c.b16 %v313, %v311
    %v354 = vpack.c.b16 %v316, %v314
    %v355 = vpack.c.b16 %v317, %v315
    %v356 = vpack.c.b16 %v320, %v318
    %v357 = vpack.c.b16 %v321, %v319
    %v358 = vpack.c.b16 %v324, %v322
    %v359 = vpack.c.b16 %v325, %v323
    %v360 = vpack.c.b16 %v328, %v326
    %v361 = vpack.c.b16 %v329, %v327
    %394 = vmatpush.bf16.msra.mxu0 %v344
    %395 = vmatpush.bf16.msra.mxu0 %v342
    %396 = vmatpush.bf16.msra.mxu0 %v340
    %397 = vmatpush.bf16.msra.mxu0 %v338
    %398 = vmatpush.bf16.msra.mxu0 %v336
    %399 = vmatpush.bf16.msra.mxu0 %v334
    %400 = vmatpush.bf16.msra.mxu0 %v332
    %401 = vmatpush.bf16.msra.mxu0 %v330
    %402 = vmatmul.bf16.gmra.mxu0 %v194
    %v403 = vpop.f32.mrf.mxu0
    %v404 = vadd.f32 %v230, %v403
    %v405 = vpop.f32.mrf.mxu0
    %v406 = vadd.f32 %v230, %v405
    %407 = vdwg.mxu0
    %408 = vmatpush.bf16.msra.mxu0 %v360
    %409 = vmatpush.bf16.msra.mxu0 %v358
    %410 = vmatpush.bf16.msra.mxu0 %v356
    %411 = vmatpush.bf16.msra.mxu0 %v354
    %412 = vmatpush.bf16.msra.mxu0 %v352
    %413 = vmatpush.bf16.msra.mxu0 %v350
    %414 = vmatpush.bf16.msra.mxu0 %v348
    %415 = vmatpush.bf16.msra.mxu0 %v346
    %416 = vmatmul.bf16.gmra.mxu0 %v195
    %v417 = vpop.f32.mrf.mxu0
    %v418 = vadd.f32 %v404, %v417
    %v419 = vpop.f32.mrf.mxu0
    %v420 = vadd.f32 %v406, %v419
    %421 = vdwg.mxu0
    %422 = vmatpush.bf16.msra.mxu0 %v345
    %423 = vmatpush.bf16.msra.mxu0 %v343
    %424 = vmatpush.bf16.msra.mxu0 %v341
    %425 = vmatpush.bf16.msra.mxu0 %v339
    %426 = vmatpush.bf16.msra.mxu0 %v337
    %427 = vmatpush.bf16.msra.mxu0 %v335
    %428 = vmatpush.bf16.msra.mxu0 %v333
    %429 = vmatpush.bf16.msra.mxu0 %v331
    %430 = vmatmul.bf16.gmra.mxu0 %v194
    %v431 = vpop.f32.mrf.mxu0
    %v432 = vadd.f32 %v231, %v431
    %v433 = vpop.f32.mrf.mxu0
    %v434 = vadd.f32 %v231, %v433
    %435 = vdwg.mxu0
    %436 = vmatpush.bf16.msra.mxu0 %v361
    %437 = vmatpush.bf16.msra.mxu0 %v359
    %438 = vmatpush.bf16.msra.mxu0 %v357
    %439 = vmatpush.bf16.msra.mxu0 %v355
    %440 = vmatpush.bf16.msra.mxu0 %v353
    %441 = vmatpush.bf16.msra.mxu0 %v351
    %442 = vmatpush.bf16.msra.mxu0 %v349
    %443 = vmatpush.bf16.msra.mxu0 %v347
    %444 = vmatmul.bf16.gmra.mxu0 %v195
    %v445 = vpop.f32.mrf.mxu0
    %v446 = vadd.f32 %v432, %v445
    %v447 = vpop.f32.mrf.mxu0
    %v448 = vadd.f32 %v434, %v447
    %449 = vdwg.mxu0
    %v450 = vmax.f32 %v418, 0.0
    %v451 = vmax.f32 %v446, 0.0
    %v452 = vmax.f32 %v420, 0.0
    %v453 = vmax.f32 %v448, 0.0
    %v454 = vmax.f32 %v450, %v451
    %v455 = vmax.f32 %v452, %v453
    %456 = vst [vmem:[%s5] sm:$0xff] %v454
    %457 = vst [vmem:[%s5 + $0x8] sm:$0xff] %v455
    // Predicated region
    $region30: #{convblock_forward.1} parent=1 // pred_check
      _
    $region31: #{convblock_forward.1} parent=1 // pred_check_branch
      %459 = sbr.rel (0) target = $region33
    $region32: #{convblock_forward.1} parent=1 // pred_region
      _
    $region33: #{convblock_forward.1} parent=1 // pred_fallthru
      _
    // Predicated region
    $region34: #{convblock_forward.1} parent=1 // pred_check
      _
    $region35: #{convblock_forward.1} parent=1 // pred_check_branch
      %461 = sbr.rel (0) target = $region37
    $region36: #{convblock_forward.1} parent=1 // pred_region
      _
    $region37: #{convblock_forward.1} parent=1 // pred_fallthru
      _
    %462 = vsyncpa [#allocation3], 1
    %463 = vsyncpa [#allocation5], 1

</llo_original>
